<compile_context>
chip_gen: v7x
topology: tpu7x:2x2x1
jax: 0.10.0
libtpu: 0.0.40
codegen_flags: <defaults>
</compile_context>

<pallas_src>
import functools

import jax
import jax.numpy as jnp
from jax.experimental import pallas as pl
from jax.experimental.pallas import tpu as pltpu

EPS = 1e-5
NEG_SLOPE = 0.2
LANE = 128
VMEM_BUDGET = 24 << 20       # conservative tiling budget (fits default scoped VMEM)
VMEM_LIMIT_CAP = 48 << 20    # never ask for more (v7x has only 64 MiB physical)


def _round_up(n, m):
    return (n + m - 1) // m * m


def _leaky_relu(v):
    # valid for 0 < slope < 1: max(v, s*v) == leaky_relu(v)
    return jnp.maximum(v, NEG_SLOPE * v)


def _bn_fold(h, gamma, beta):
    """Training-mode BatchNorm1d folded into one scale/shift (single VPU FMA)."""
    mean = jnp.mean(h, axis=0, keepdims=True)
    var = jnp.mean((h - mean) * (h - mean), axis=0, keepdims=True)
    scale = jax.lax.rsqrt(var + EPS) * gamma      # rsqrt goes to the EUP slot
    shift = beta - mean * scale
    return h * scale + shift


def fc_resblock_kernel(xb_ref, w1_ref, p1_ref, w2_ref, p2_ref, *rest,
                       use_bn, final_nl, has_fc3):
    if has_fc3:
        w3_ref, o_ref, res_ref = rest
    else:
        xf_ref, o_ref = rest

    k = pl.program_id(0)
    nk = pl.num_programs(0)

    xb = xb_ref[...]                    # [B, Fin_p] bf16, resident across k

    # ---- fc1 column tile -> bn1 -> leaky_relu (per-feature, tiling-safe) ----
    p1 = p1_ref[...]                    # [8, tile_n] f32: rows b1, g1, be1
    h = jnp.dot(xb, w1_ref[...], preferred_element_type=jnp.float32)
    h = h + p1[0:1, :]
    if use_bn:
        h = _bn_fold(h, p1[1:2, :], p1[2:3, :])
    h = _leaky_relu(h)

    # ---- fc2 partial product, accumulated in f32 directly in o_ref ----------
    partial = jnp.dot(h.astype(jnp.bfloat16), w2_ref[...],
                      preferred_element_type=jnp.float32)

    @pl.when(k == 0)
    def _first():
        o_ref[...] = partial
        if has_fc3:
            # residual branch issued on step 0 so it overlaps the w1/w2 stream
            res_ref[...] = _leaky_relu(
                jnp.dot(xb, w3_ref[...], preferred_element_type=jnp.float32)
                + p2_ref[3:4, :])

    @pl.when(k > 0)
    def _accum():
        o_ref[...] += partial

    # ---- finalize on the last hidden tile ------------------------------------
    @pl.when(k == nk - 1)
    def _finalize():
        p2 = p2_ref[...]                # [8, Fout_p] f32: rows b2, g2, be2, b3
        out = o_ref[...] + p2[0:1, :]
        if use_bn:
            out = _bn_fold(out, p2[1:2, :], p2[2:3, :])
        xin = res_ref[...] if has_fc3 else xf_ref[...]   # exact f32 identity path
        out = xin + out
        if final_nl:
            out = _leaky_relu(out)
        o_ref[...] = out


def _vmem_plan_bytes(B, fin_p, tile_n, fout_p, has_fc3):
    """Pessimistic VMEM footprint (default double buffering on every spec)."""
    b = 2 * B * fin_p * 2                 # x bf16
    b += 2 * fin_p * tile_n * 2           # w1 column tile
    b += 2 * 8 * tile_n * 4               # p1 tile
    b += 2 * tile_n * fout_p * 2          # w2 row tile
    b += 2 * 8 * fout_p * 4               # p2
    b += 2 * B * fout_p * 4               # output accumulator
    if has_fc3:
        b += 2 * fin_p * fout_p * 2       # w3 resident
        b += B * fout_p * 4               # residual scratch
    else:
        b += 2 * B * fout_p * 4           # f32 x for identity residual
    return b


def _pick_tile_n(B, fin_p, np_, fout_p, has_fc3):
    """Largest hidden tile (ideally the whole reduction) that fits the budget."""
    candidates = [np_] + [t for t in (512, 384, 256, 128)
                          if t < np_ and np_ % t == 0]
    for t in candidates:
        if _vmem_plan_bytes(B, fin_p, t, fout_p, has_fc3) <= VMEM_BUDGET:
            return t
    return 128


def fc_resblock(x, packed, *, use_bn=True, final_nl=True, tile_n=None):
    """x: [B, Fin] f32.  `packed` comes from pack_params()."""
    B, fin = x.shape
    fout = packed["fout"]
    fin_p, np_ = packed["w1"].shape
    fout_p = packed["w2"].shape[1]
    has_fc3 = packed["w3"] is not None

    if tile_n is None:
        tile_n = _pick_tile_n(B, fin_p, np_, fout_p, has_fc3)
    assert np_ % tile_n == 0
    nk = np_ // tile_n

    x_p = jnp.pad(x, ((0, 0), (0, fin_p - fin))) if fin_p != fin else x
    xb = x_p.astype(jnp.bfloat16)         # cast once, outside the grid loop

    in_specs = [
        pl.BlockSpec((B, fin_p), lambda k: (0, 0)),           # x bf16 (resident)
        pl.BlockSpec((fin_p, tile_n), lambda k: (0, k)),       # w1 column tile
        pl.BlockSpec((8, tile_n), lambda k: (0, k)),           # b1/g1/be1 tile
        pl.BlockSpec((tile_n, fout_p), lambda k: (k, 0)),      # w2 row tile
        pl.BlockSpec((8, fout_p), lambda k: (0, 0)),           # b2/g2/be2/b3
    ]
    args = [xb, packed["w1"], packed["p1"], packed["w2"], packed["p2"]]
    scratch_shapes = []
    if has_fc3:
        in_specs.append(pl.BlockSpec((fin_p, fout_p), lambda k: (0, 0)))
        args.append(packed["w3"])
        scratch_shapes.append(pltpu.VMEM((B, fout_p), jnp.float32))
    else:
        # exact f32 identity residual (fin == fout so fin_p == fout_p)
        in_specs.append(pl.BlockSpec((B, fout_p), lambda k: (0, 0)))
        args.append(x_p)

    kernel = functools.partial(fc_resblock_kernel, use_bn=use_bn,
                               final_nl=final_nl, has_fc3=has_fc3)

    flops = 2 * B * (fin_p * np_ + np_ * fout_p
                     + (fin_p * fout_p if has_fc3 else 0))
    bytes_accessed = (xb.size * 2 + packed["w1"].size * 2
                      + packed["w2"].size * 2
                      + (packed["w3"].size * 2 if has_fc3 else x_p.size * 4)
                      + packed["p1"].size * 4 + packed["p2"].size * 4
                      + B * fout_p * 4)
    transcendentals = (np_ + fout_p) if use_bn else 0

    vmem_limit = min(max(2 * _vmem_plan_bytes(B, fin_p, tile_n, fout_p, has_fc3),
                         32 << 20), VMEM_LIMIT_CAP)

    # TODO(synk): on v7x a leading "parallel" grid axis over fout tiles (tiling
    # w2 columns / p2 / w3 / output) would use the second TensorCore; omitted
    # here because BN2+residual finalize would then recompute fc1 per fout tile.
    # TODO(synk): stacked FCResBlocks should be chained inside one pallas_call
    # so activations stay VMEM-resident between layers.
    out = pl.pallas_call(
        kernel,
        out_shape=jax.ShapeDtypeStruct((B, fout_p), jnp.float32),
        grid_spec=pltpu.PrefetchScalarGridSpec(
            num_scalar_prefetch=0,
            grid=(nk,),
            in_specs=in_specs,
            out_specs=pl.BlockSpec((B, fout_p), lambda k: (0, 0)),
            scratch_shapes=scratch_shapes,
        ),
        compiler_params=pltpu.CompilerParams(
            dimension_semantics=("arbitrary",),          # reduction over hidden dim
            vmem_limit_bytes=vmem_limit,
        ),
        cost_estimate=pl.CostEstimate(
            flops=flops, transcendentals=transcendentals,
            bytes_accessed=bytes_accessed),
    )(*args)
    return out[:, :fout]


def init_params(key, fin, fout, n_neurons):
    """Raw f32 params mirroring nn.Linear (U[+/-1/sqrt(fan_in)]) and
    nn.BatchNorm1d (gamma=1, beta=0) defaults; weights stored as [in, out]."""
    ks = jax.random.split(key, 6)

    def lin(kw, kb, f_in, f_out):
        bound = 1.0 / jnp.sqrt(f_in)
        w = jax.random.uniform(kw, (f_in, f_out), jnp.float32, -bound, bound)
        b = jax.random.uniform(kb, (f_out,), jnp.float32, -bound, bound)
        return w, b

    w1, b1 = lin(ks[0], ks[1], fin, n_neurons)
    w2, b2 = lin(ks[2], ks[3], n_neurons, fout)
    raw = {
        "w1": w1, "b1": b1,
        "g1": jnp.ones((n_neurons,), jnp.float32),
        "be1": jnp.zeros((n_neurons,), jnp.float32),
        "w2": w2, "b2": b2,
        "g2": jnp.ones((fout,), jnp.float32),
        "be2": jnp.zeros((fout,), jnp.float32),
    }
    if fin != fout:
        raw["w3"], raw["b3"] = lin(ks[4], ks[5], fin, fout)
    return raw


def pack_params(raw, fin, fout, n_neurons):
    """Pad feature dims to multiples of 128 (lane-dense), cast weights to bf16,
    pack the per-feature vectors into two [8, N] f32 slabs."""
    fin_p = _round_up(fin, LANE)
    np_ = _round_up(n_neurons, LANE)
    fout_p = _round_up(fout, LANE)

    def pad2(w, r, c):
        return jnp.pad(w, ((0, r - w.shape[0]), (0, c - w.shape[1])))

    def pack_rows(rows, width):
        rows = [jnp.pad(r, (0, width - r.shape[0])) for r in rows]
        slab = jnp.stack(rows, axis=0)
        return jnp.pad(slab, ((0, 8 - slab.shape[0]), (0, 0)))

    return {
        "fout": fout,
        "w1": pad2(raw["w1"], fin_p, np_).astype(jnp.bfloat16),
        "w2": pad2(raw["w2"], np_, fout_p).astype(jnp.bfloat16),
        "p1": pack_rows([raw["b1"], raw["g1"], raw["be1"]], np_),
        "p2": pack_rows([raw["b2"], raw["g2"], raw["be2"],
                         raw.get("b3", jnp.zeros((fout,), jnp.float32))], fout_p),
        "w3": (pad2(raw["w3"], fin_p, fout_p).astype(jnp.bfloat16)
               if "w3" in raw else None),
    }


def reference(x, raw, *, fin, fout, use_bn=True, final_nl=True):
    """Pure-JAX FCResBlock forward (training-mode BN) with the same
    bf16-matmul / f32-accumulate numerics the kernel uses."""
    def mm(a, w):
        return jnp.dot(a.astype(jnp.bfloat16), w.astype(jnp.bfloat16),
                       preferred_element_type=jnp.float32)

    def bn(h, g, b):
        m = jnp.mean(h, axis=0, keepdims=True)
        v = jnp.mean((h - m) ** 2, axis=0, keepdims=True)
        return (h - m) / jnp.sqrt(v + EPS) * g + b

    lrelu = lambda v: jnp.where(v >= 0, v, NEG_SLOPE * v)
    xin = x if fin == fout else lrelu(mm(x, raw["w3"]) + raw["b3"])
    h = mm(x, raw["w1"]) + raw["b1"]
    if use_bn:
        h = bn(h, raw["g1"], raw["be1"])
    h = lrelu(h)
    h = mm(h, raw["w2"]) + raw["b2"]
    if use_bn:
        h = bn(h, raw["g2"], raw["be2"])
    out = xin + h
    return lrelu(out) if final_nl else out


if __name__ == "__main__":
    key = jax.random.PRNGKey(0)

    # (B, Fin, Fout, n_neurons, use_bn, final_nl)
    cases = [
        (16, 64, 128, 256, True, True),    # fc3 residual; single grid step (nk=1)
        (16, 72, 72, 200, True, False),    # identity residual, non-aligned dims
        (16, 128, 128, 256, False, True),  # use_bn=False branch
        (16, 64, 128, 1024, True, True),   # larger hidden dim exercises tiling path
    ]
    for i, (B, fin, fout, n_neurons, use_bn, final_nl) in enumerate(cases):
        kx, kp, key = jax.random.split(key, 3)
        x = jax.random.normal(kx, (B, fin), jnp.float32)
        raw = init_params(kp, fin, fout, n_neurons)
        packed = pack_params(raw, fin, fout, n_neurons)

        out = fc_resblock(x, packed, use_bn=use_bn, final_nl=final_nl)
        out = jax.block_until_ready(out)

        ref = reference(x, raw, fin=fin, fout=fout,
                        use_bn=use_bn, final_nl=final_nl)
        assert out.shape == (B, fout)
        assert jnp.allclose(out, ref, atol=5e-3, rtol=5e-3), \
            f"case {i}: mismatch vs reference"

    # TODO(synk): with use_bn=True a batch-tiled / megacore-parallel variant needs a
    # cross-tile mean/var reduction (BatchNorm couples the whole batch), so the batch
    # stays in a single tile here.
    print("KERNEL_OK")
</pallas_src>

<mosaic_0001>
module attributes {stable_mosaic.version = 11 : i64} {
  func.func @fc_resblock_kernel(%arg0: i32, %arg1: memref<16x128xbf16, #tpu.memory_space<vmem>>, %arg2: memref<128x256xbf16, #tpu.memory_space<vmem>>, %arg3: memref<8x256xf32, #tpu.memory_space<vmem>>, %arg4: memref<256x128xbf16, #tpu.memory_space<vmem>>, %arg5: memref<8x128xf32, #tpu.memory_space<vmem>>, %arg6: memref<128x128xbf16, #tpu.memory_space<vmem>>, %arg7: memref<16x128xf32, #tpu.memory_space<vmem>>, %arg8: memref<16x128xf32, #tpu.memory_space<vmem>>) attributes {dimension_semantics = [#tpu.dimension_semantics<arbitrary>], iteration_bounds = array<i64: 1>, scalar_prefetch = 0 : i64, scratch_operands = 1 : i64, tpu.core_type = #tpu.core_type<tc>, window_params = [{pipeline_mode = #tpu.pipeline_mode<synchronous>, transform_indices = @transform_0, window_bounds = array<i64: 16, 128>}, {transform_indices = @transform_1, window_bounds = array<i64: 128, 256>}, {transform_indices = @transform_2, window_bounds = array<i64: 8, 256>}, {transform_indices = @transform_3, window_bounds = array<i64: 256, 128>}, {pipeline_mode = #tpu.pipeline_mode<synchronous>, transform_indices = @transform_4, window_bounds = array<i64: 8, 128>}, {pipeline_mode = #tpu.pipeline_mode<synchronous>, transform_indices = @transform_5, window_bounds = array<i64: 128, 128>}, {pipeline_mode = #tpu.pipeline_mode<synchronous>, transform_indices = @transform_6, window_bounds = array<i64: 16, 128>}]} {
    %c0 = arith.constant 0 : index
    %c0_0 = arith.constant 0 : index
    %0 = vector.load %arg1[%c0, %c0_0] : memref<16x128xbf16, #tpu.memory_space<vmem>>, vector<16x128xbf16>
    %c0_1 = arith.constant 0 : index
    %c0_2 = arith.constant 0 : index
    %1 = vector.load %arg3[%c0_1, %c0_2] : memref<8x256xf32, #tpu.memory_space<vmem>>, vector<8x256xf32>
    %c0_3 = arith.constant 0 : index
    %c0_4 = arith.constant 0 : index
    %2 = vector.load %arg2[%c0_3, %c0_4] : memref<128x256xbf16, #tpu.memory_space<vmem>>, vector<128x256xbf16>
    %cst = arith.constant dense<0.000000e+00> : vector<16x256xf32>
    %3 = tpu.matmul %0, %2, %cst {dimension_numbers = #tpu.dot_dimension_numbers<[1], [0], [0], [1], [0, 0, 1, 1], [], []>} : vector<16x128xbf16>, vector<128x256xbf16>, vector<16x256xf32> -> vector<16x256xf32>
    %4 = vector.extract_strided_slice %1 {offsets = [0, 0], sizes = [1, 256], strides = [1, 1]} : vector<8x256xf32> to vector<1x256xf32>
    %5 = vector.broadcast %4 : vector<1x256xf32> to vector<16x256xf32>
    %6 = arith.addf %3, %5 : vector<16x256xf32>
    %7 = vector.extract_strided_slice %1 {offsets = [1, 0], sizes = [1, 256], strides = [1, 1]} : vector<8x256xf32> to vector<1x256xf32>
    %8 = vector.extract_strided_slice %1 {offsets = [2, 0], sizes = [1, 256], strides = [1, 1]} : vector<8x256xf32> to vector<1x256xf32>
    %cst_5 = arith.constant dense<0.000000e+00> : vector<256xf32>
    %9 = vector.multi_reduction <add>, %6, %cst_5 [0] : vector<16x256xf32> to vector<256xf32>
    %10 = vector.shape_cast %9 : vector<256xf32> to vector<1x256xf32>
    %cst_6 = arith.constant 1.600000e+01 : f32
    %11 = vector.broadcast %cst_6 : f32 to vector<1x256xf32>
    %12 = arith.divf %10, %11 : vector<1x256xf32>
    %13 = vector.broadcast %12 : vector<1x256xf32> to vector<16x256xf32>
    %14 = arith.subf %6, %13 : vector<16x256xf32>
    %15 = vector.broadcast %12 : vector<1x256xf32> to vector<16x256xf32>
    %16 = arith.subf %6, %15 : vector<16x256xf32>
    %17 = arith.mulf %14, %16 : vector<16x256xf32>
    %cst_7 = arith.constant dense<0.000000e+00> : vector<256xf32>
    %18 = vector.multi_reduction <add>, %17, %cst_7 [0] : vector<16x256xf32> to vector<256xf32>
    %19 = vector.shape_cast %18 : vector<256xf32> to vector<1x256xf32>
    %cst_8 = arith.constant 1.600000e+01 : f32
    %20 = vector.broadcast %cst_8 : f32 to vector<1x256xf32>
    %21 = arith.divf %19, %20 : vector<1x256xf32>
    %cst_9 = arith.constant 9.99999974E-6 : f32
    %22 = vector.broadcast %cst_9 : f32 to vector<1x256xf32>
    %23 = arith.addf %21, %22 : vector<1x256xf32>
    %24 = math.rsqrt %23 : vector<1x256xf32>
    %25 = arith.mulf %24, %7 : vector<1x256xf32>
    %26 = arith.mulf %12, %25 : vector<1x256xf32>
    %27 = arith.subf %8, %26 : vector<1x256xf32>
    %28 = vector.broadcast %25 : vector<1x256xf32> to vector<16x256xf32>
    %29 = arith.mulf %6, %28 : vector<16x256xf32>
    %30 = vector.broadcast %27 : vector<1x256xf32> to vector<16x256xf32>
    %31 = arith.addf %29, %30 : vector<16x256xf32>
    %cst_10 = arith.constant 2.000000e-01 : f32
    %32 = vector.broadcast %cst_10 : f32 to vector<16x256xf32>
    %33 = arith.mulf %32, %31 : vector<16x256xf32>
    %34 = arith.maximumf %31, %33 : vector<16x256xf32>
    %35 = arith.truncf %34 : vector<16x256xf32> to vector<16x256xbf16>
    %c0_11 = arith.constant 0 : index
    %c0_12 = arith.constant 0 : index
    %36 = vector.load %arg4[%c0_11, %c0_12] : memref<256x128xbf16, #tpu.memory_space<vmem>>, vector<256x128xbf16>
    %cst_13 = arith.constant dense<0.000000e+00> : vector<16x128xf32>
    %37 = tpu.matmul %35, %36, %cst_13 {dimension_numbers = #tpu.dot_dimension_numbers<[1], [0], [0], [1], [0, 0, 1, 1], [], []>} : vector<16x256xbf16>, vector<256x128xbf16>, vector<16x128xf32> -> vector<16x128xf32>
    %c0_i32 = arith.constant 0 : i32
    %38 = arith.cmpi eq, %arg0, %c0_i32 : i32
    %39 = arith.extui %38 : i1 to i32
    %c0_i32_14 = arith.constant 0 : i32
    %40 = arith.cmpi ne, %39, %c0_i32_14 : i32
    scf.if %40 {
      %c0_19 = arith.constant 0 : index
      %c0_20 = arith.constant 0 : index
      %47 = vector.load %arg7[%c0_19, %c0_20] : memref<16x128xf32, #tpu.memory_space<vmem>>, vector<16x128xf32>
      tpu.vector_store %arg7[%c0_19, %c0_20], %37 {strides = array<i32>} : memref<16x128xf32, #tpu.memory_space<vmem>>, vector<16x128xf32>,
      %c0_21 = arith.constant 0 : index
      %c0_22 = arith.constant 0 : index
      %48 = vector.load %arg6[%c0_21, %c0_22] : memref<128x128xbf16, #tpu.memory_space<vmem>>, vector<128x128xbf16>
      %cst_23 = arith.constant dense<0.000000e+00> : vector<16x128xf32>
      %49 = tpu.matmul %0, %48, %cst_23 {dimension_numbers = #tpu.dot_dimension_numbers<[1], [0], [0], [1], [0, 0, 1, 1], [], []>} : vector<16x128xbf16>, vector<128x128xbf16>, vector<16x128xf32> -> vector<16x128xf32>
      %c3 = arith.constant 3 : index
      %c0_24 = arith.constant 0 : index
      %50 = vector.load %arg5[%c3, %c0_24] : memref<8x128xf32, #tpu.memory_space<vmem>>, vector<1x128xf32>
      %51 = vector.broadcast %50 : vector<1x128xf32> to vector<16x128xf32>
      %52 = arith.addf %49, %51 : vector<16x128xf32>
      %cst_25 = arith.constant 2.000000e-01 : f32
      %53 = vector.broadcast %cst_25 : f32 to vector<16x128xf32>
      %54 = arith.mulf %53, %52 : vector<16x128xf32>
      %55 = arith.maximumf %52, %54 : vector<16x128xf32>
      %c0_26 = arith.constant 0 : index
      %c0_27 = arith.constant 0 : index
      %56 = vector.load %arg8[%c0_26, %c0_27] : memref<16x128xf32, #tpu.memory_space<vmem>>, vector<16x128xf32>
      tpu.vector_store %arg8[%c0_26, %c0_27], %55 {strides = array<i32>} : memref<16x128xf32, #tpu.memory_space<vmem>>, vector<16x128xf32>,
    } else {
    }
    %c0_i32_15 = arith.constant 0 : i32
    %41 = arith.cmpi sgt, %arg0, %c0_i32_15 : i32
    %42 = arith.extui %41 : i1 to i32
    %c0_i32_16 = arith.constant 0 : i32
    %43 = arith.cmpi ne, %42, %c0_i32_16 : i32
    scf.if %43 {
      %c0_19 = arith.constant 0 : index
      %c0_20 = arith.constant 0 : index
      %47 = vector.load %arg7[%c0_19, %c0_20] : memref<16x128xf32, #tpu.memory_space<vmem>>, vector<16x128xf32>
      %48 = arith.addf %47, %37 : vector<16x128xf32>
      %c0_21 = arith.constant 0 : index
      %c0_22 = arith.constant 0 : index
      %49 = vector.load %arg7[%c0_21, %c0_22] : memref<16x128xf32, #tpu.memory_space<vmem>>, vector<16x128xf32>
      tpu.vector_store %arg7[%c0_21, %c0_22], %48 {strides = array<i32>} : memref<16x128xf32, #tpu.memory_space<vmem>>, vector<16x128xf32>,
    } else {
    }
    %c0_i32_17 = arith.constant 0 : i32
    %44 = arith.cmpi eq, %arg0, %c0_i32_17 : i32
    %45 = arith.extui %44 : i1 to i32
    %c0_i32_18 = arith.constant 0 : i32
    %46 = arith.cmpi ne, %45, %c0_i32_18 : i32
    scf.if %46 {
      %c0_19 = arith.constant 0 : index
      %c0_20 = arith.constant 0 : index
      %47 = vector.load %arg5[%c0_19, %c0_20] : memref<8x128xf32, #tpu.memory_space<vmem>>, vector<8x128xf32>
      %c0_21 = arith.constant 0 : index
      %c0_22 = arith.constant 0 : index
      %48 = vector.load %arg7[%c0_21, %c0_22] : memref<16x128xf32, #tpu.memory_space<vmem>>, vector<16x128xf32>
      %49 = vector.extract_strided_slice %47 {offsets = [0, 0], sizes = [1, 128], strides = [1, 1]} : vector<8x128xf32> to vector<1x128xf32>
      %50 = vector.broadcast %49 : vector<1x128xf32> to vector<16x128xf32>
      %51 = arith.addf %48, %50 : vector<16x128xf32>
      %52 = vector.extract_strided_slice %47 {offsets = [1, 0], sizes = [1, 128], strides = [1, 1]} : vector<8x128xf32> to vector<1x128xf32>
      %53 = vector.extract_strided_slice %47 {offsets = [2, 0], sizes = [1, 128], strides = [1, 1]} : vector<8x128xf32> to vector<1x128xf32>
      %cst_23 = arith.constant dense<0.000000e+00> : vector<128xf32>
      %54 = vector.multi_reduction <add>, %51, %cst_23 [0] : vector<16x128xf32> to vector<128xf32>
      %55 = vector.shape_cast %54 : vector<128xf32> to vector<1x128xf32>
      %cst_24 = arith.constant 1.600000e+01 : f32
      %56 = vector.broadcast %cst_24 : f32 to vector<1x128xf32>
      %57 = arith.divf %55, %56 : vector<1x128xf32>
      %58 = vector.broadcast %57 : vector<1x128xf32> to vector<16x128xf32>
      %59 = arith.subf %51, %58 : vector<16x128xf32>
      %60 = vector.broadcast %57 : vector<1x128xf32> to vector<16x128xf32>
      %61 = arith.subf %51, %60 : vector<16x128xf32>
      %62 = arith.mulf %59, %61 : vector<16x128xf32>
      %cst_25 = arith.constant dense<0.000000e+00> : vector<128xf32>
      %63 = vector.multi_reduction <add>, %62, %cst_25 [0] : vector<16x128xf32> to vector<128xf32>
      %64 = vector.shape_cast %63 : vector<128xf32> to vector<1x128xf32>
      %cst_26 = arith.constant 1.600000e+01 : f32
      %65 = vector.broadcast %cst_26 : f32 to vector<1x128xf32>
      %66 = arith.divf %64, %65 : vector<1x128xf32>
      %cst_27 = arith.constant 9.99999974E-6 : f32
      %67 = vector.broadcast %cst_27 : f32 to vector<1x128xf32>
      %68 = arith.addf %66, %67 : vector<1x128xf32>
      %69 = math.rsqrt %68 : vector<1x128xf32>
      %70 = arith.mulf %69, %52 : vector<1x128xf32>
      %71 = arith.mulf %57, %70 : vector<1x128xf32>
      %72 = arith.subf %53, %71 : vector<1x128xf32>
      %73 = vector.broadcast %70 : vector<1x128xf32> to vector<16x128xf32>
      %74 = arith.mulf %51, %73 : vector<16x128xf32>
      %75 = vector.broadcast %72 : vector<1x128xf32> to vector<16x128xf32>
      %76 = arith.addf %74, %75 : vector<16x128xf32>
      %c0_28 = arith.constant 0 : index
      %c0_29 = arith.constant 0 : index
      %77 = vector.load %arg8[%c0_28, %c0_29] : memref<16x128xf32, #tpu.memory_space<vmem>>, vector<16x128xf32>
      %78 = arith.addf %77, %76 : vector<16x128xf32>
      %cst_30 = arith.constant 2.000000e-01 : f32
      %79 = vector.broadcast %cst_30 : f32 to vector<16x128xf32>
      %80 = arith.mulf %79, %78 : vector<16x128xf32>
      %81 = arith.maximumf %78, %80 : vector<16x128xf32>
      %c0_31 = arith.constant 0 : index
      %c0_32 = arith.constant 0 : index
      %82 = vector.load %arg7[%c0_31, %c0_32] : memref<16x128xf32, #tpu.memory_space<vmem>>, vector<16x128xf32>
      tpu.vector_store %arg7[%c0_31, %c0_32], %81 {strides = array<i32>} : memref<16x128xf32, #tpu.memory_space<vmem>>, vector<16x128xf32>,
    } else {
    }
    return
  }
  func.func @transform_0(%arg0: i32) -> (i32, i32) {
    %c0_i32 = arith.constant 0 : i32
    %c0_i32_0 = arith.constant 0 : i32
    %c0_i32_1 = arith.constant 0 : i32
    return %c0_i32, %c0_i32_0 : i32, i32
  }
  func.func @transform_1(%arg0: i32) -> (i32, i32) {
    %c0_i32 = arith.constant 0 : i32
    %c0_i32_0 = arith.constant 0 : i32
    return %c0_i32, %arg0 : i32, i32
  }
  func.func @transform_2(%arg0: i32) -> (i32, i32) {
    %c0_i32 = arith.constant 0 : i32
    %c0_i32_0 = arith.constant 0 : i32
    return %c0_i32, %arg0 : i32, i32
  }
  func.func @transform_3(%arg0: i32) -> (i32, i32) {
    %c0_i32 = arith.constant 0 : i32
    %c0_i32_0 = arith.constant 0 : i32
    return %arg0, %c0_i32 : i32, i32
  }
  func.func @transform_4(%arg0: i32) -> (i32, i32) {
    %c0_i32 = arith.constant 0 : i32
    %c0_i32_0 = arith.constant 0 : i32
    %c0_i32_1 = arith.constant 0 : i32
    return %c0_i32, %c0_i32_0 : i32, i32
  }
  func.func @transform_5(%arg0: i32) -> (i32, i32) {
    %c0_i32 = arith.constant 0 : i32
    %c0_i32_0 = arith.constant 0 : i32
    %c0_i32_1 = arith.constant 0 : i32
    return %c0_i32, %c0_i32_0 : i32, i32
  }
  func.func @transform_6(%arg0: i32) -> (i32, i32) {
    %c0_i32 = arith.constant 0 : i32
    %c0_i32_0 = arith.constant 0 : i32
    %c0_i32_1 = arith.constant 0 : i32
    return %c0_i32, %c0_i32_0 : i32, i32
  }
}

</mosaic_0001>

<llo_original>
// kernel: tpu_custom_call.1
$region0: #{tpu_custom_call.1}
  #allocation0 [shape = 'u32[]', space=smem, size = 0x4, offset = 0x4, fixed_abs, tag = 'smem constant byte address 0x4 - core index']
  #allocation1 [shape = 'u32[144,128]{1,0:T(1,128)}', space=vmem, size = 0x12000, scoped, tag = 'internal scratch']
  #allocation2 [shape = 'f32[16,128]{1,0:T(8,128)}', space=vmem, size = 0x2000, scoped, tag = 'scratch operand']
  %s0 = inlined_call_operand.hbm [shape: bf16[16,128], index: 0, kind: input, shape index: {}]
  %s1 = inlined_call_operand.hbm [shape: bf16[128,256], index: 1, kind: input, shape index: {}]
  %s2 = inlined_call_operand.hbm [shape: f32[8,256], index: 2, kind: input, shape index: {}]
  %s3 = inlined_call_operand.hbm [shape: bf16[256,128], index: 3, kind: input, shape index: {}]
  %s4 = inlined_call_operand.vmem [shape: f32[8,128], index: 4, kind: input, shape index: {}]
  %s5 = inlined_call_operand.hbm [shape: bf16[128,128], index: 5, kind: input, shape index: {}]
  %s6 = inlined_call_operand.hbm [shape: f32[16,128], index: 6, kind: output, shape index: {}]
  %s7 = sld [smem:[#allocation0]]
  $region66: #{tpu_custom_call.1} parent=0
    _
  %s9 = ssub.s32 1, %s7
  %s10 = scalar_select 0, %s9, %s7
  $region1: #{tpu_custom_call.1} parent=0
    #allocation3 [shape = 'u8[4096]{0}', space=vmem, size = 0x1000, scoped, tag = 'input window, operand 0, single buffered']
    #allocation4 [shape = 's32[1]{0}', space=sflag, size = 0x4, scoped, tag = 'scoped memory for tpu_custom_call.1']
    #allocation5 [shape = 's32[1]{0}', space=sflag, size = 0x4, scoped, tag = 'scoped memory for tpu_custom_call.1']
    #allocation6 [shape = 'u8[65536]{0}', space=vmem, size = 0x10000, scoped, tag = 'input window, operand 1, single buffered']
    #allocation7 [shape = 's32[1]{0}', space=sflag, size = 0x4, scoped, tag = 'scoped memory for tpu_custom_call.1']
    #allocation8 [shape = 'u8[8192]{0}', space=vmem, size = 0x2000, scoped, tag = 'input window, operand 2, single buffered']
    #allocation9 [shape = 'u8[65536]{0}', space=vmem, size = 0x10000, scoped, tag = 'input window, operand 3, single buffered']
    #allocation10 [shape = 's32[1]{0}', space=sflag, size = 0x4, scoped, tag = 'scoped memory for tpu_custom_call.1']
    #allocation11 [shape = 'u8[32768]{0}', space=vmem, size = 0x8000, scoped, tag = 'input window, operand 5, single buffered']
    #allocation12 [shape = 'u8[8192]{0}', space=vmem, size = 0x2000, scoped, tag = 'output window, operand 0, single buffered']
    %11 = vsyncpa [#allocation4], 0
    %12 = vsyncpa [#allocation7], 0
    %13 = vsyncpa [#allocation10], 0
    %14 = vsyncpa [#allocation5], 0
    // Predicated region
    $region2: #{tpu_custom_call.1} parent=1 // pred_check
      _
    $region3: #{tpu_custom_call.1} parent=1 // pred_check_branch
      %16 = sbr.rel (0) target = $region5
    $region4: #{tpu_custom_call.1} parent=1 // pred_region
      %s18 = ssub.s32 128, 128
      %19 = vsyncadd [#allocation4], %s18
      %s20 = sshll.u32 [#allocation3], 4
      %s21 = int_to_ptr.vmem [resolvable:$true] %s20
      %26 = dma.hbm_to_vmem [thread:$0]  %s0, 128, %s21, [#allocation4], 64, 64, 4
    $region5: #{tpu_custom_call.1} parent=1 // pred_fallthru
      _
    // Predicated region
    $region6: #{tpu_custom_call.1} parent=1 // pred_check
      _
    $region7: #{tpu_custom_call.1} parent=1 // pred_check_branch
      %28 = sbr.rel (0) target = $region9
    $region8: #{tpu_custom_call.1} parent=1 // pred_region
      %s30 = ssub.s32 2048, 2048
      %31 = vsyncadd [#allocation7], %s30
      %s32 = sshll.u32 [#allocation6], 4
      %s33 = int_to_ptr.vmem [resolvable:$true] %s32
      %38 = dma.hbm_to_vmem [thread:$0]  %s1, 2048, %s33, [#allocation7], 128, 128, 8
    $region9: #{tpu_custom_call.1} parent=1 // pred_fallthru
      _
    // Predicated region
    $region10: #{tpu_custom_call.1} parent=1 // pred_check
      _
    $region11: #{tpu_custom_call.1} parent=1 // pred_check_branch
      %40 = sbr.rel (0) target = $region13
    $region12: #{tpu_custom_call.1} parent=1 // pred_region
      %s42 = ssub.s32 256, 256
      %43 = vsyncadd [#allocation7], %s42
      %s45 = sshll.u32 [#allocation8], 4
      %s46 = int_to_ptr.vmem [resolvable:$true] %s45
      %48 = dma.hbm_to_vmem [thread:$0]  %s2, 256, %s46, [#allocation7]
    $region13: #{tpu_custom_call.1} parent=1 // pred_fallthru
      _
    // Predicated region
    $region14: #{tpu_custom_call.1} parent=1 // pred_check
      _
    $region15: #{tpu_custom_call.1} parent=1 // pred_check_branch
      %50 = sbr.rel (0) target = $region17
    $region16: #{tpu_custom_call.1} parent=1 // pred_region
      %s52 = ssub.s32 2048, 2048
      %53 = vsyncadd [#allocation10], %s52
      %s54 = sshll.u32 [#allocation9], 4
      %s55 = int_to_ptr.vmem [resolvable:$true] %s54
      %60 = dma.hbm_to_vmem [thread:$0]  %s3, 2048, %s55, [#allocation10], 64, 64, 4
    $region17: #{tpu_custom_call.1} parent=1 // pred_fallthru
      _
    // Predicated region
    $region18: #{tpu_custom_call.1} parent=1 // pred_check
      _
    $region19: #{tpu_custom_call.1} parent=1 // pred_check_branch
      %62 = sbr.rel (0) target = $region21
    $region20: #{tpu_custom_call.1} parent=1 // pred_region
      _
    $region21: #{tpu_custom_call.1} parent=1 // pred_fallthru
      _
    // Predicated region
    $region22: #{tpu_custom_call.1} parent=1 // pred_check
      _
    $region23: #{tpu_custom_call.1} parent=1 // pred_check_branch
      %64 = sbr.rel (0) target = $region25
    $region24: #{tpu_custom_call.1} parent=1 // pred_region
      %s66 = ssub.s32 1024, 1024
      %67 = vsyncadd [#allocation10], %s66
      %s68 = sshll.u32 [#allocation11], 4
      %s69 = int_to_ptr.vmem [resolvable:$true] %s68
      %74 = dma.hbm_to_vmem [thread:$0]  %s5, 1024, %s69, [#allocation10], 64, 64, 4
    $region25: #{tpu_custom_call.1} parent=1 // pred_fallthru
      _
    // Predicated region
    $region26: #{tpu_custom_call.1} parent=1 // pred_check
      _
    $region27: #{tpu_custom_call.1} parent=1 // pred_check_branch
      %76 = sbr.rel (0) target = $region29
    $region28: #{tpu_custom_call.1} parent=1 // pred_region
      %77 = dma.done [#allocation4], 128
    $region29: #{tpu_custom_call.1} parent=1 // pred_fallthru
      _
    // Predicated region
    $region30: #{tpu_custom_call.1} parent=1 // pred_check
      _
    $region31: #{tpu_custom_call.1} parent=1 // pred_check_branch
      %79 = sbr.rel (0) target = $region33
    $region32: #{tpu_custom_call.1} parent=1 // pred_region
      %80 = dma.done [#allocation7], 2048
    $region33: #{tpu_custom_call.1} parent=1 // pred_fallthru
      _
    // Predicated region
    $region34: #{tpu_custom_call.1} parent=1 // pred_check
      _
    $region35: #{tpu_custom_call.1} parent=1 // pred_check_branch
      %82 = sbr.rel (0) target = $region37
    $region36: #{tpu_custom_call.1} parent=1 // pred_region
      %83 = dma.done [#allocation7], 256
    $region37: #{tpu_custom_call.1} parent=1 // pred_fallthru
      _
    // Predicated region
    $region38: #{tpu_custom_call.1} parent=1 // pred_check
      _
    $region39: #{tpu_custom_call.1} parent=1 // pred_check_branch
      %85 = sbr.rel (0) target = $region41
    $region40: #{tpu_custom_call.1} parent=1 // pred_region
      %86 = dma.done [#allocation10], 2048
    $region41: #{tpu_custom_call.1} parent=1 // pred_fallthru
      _
    // Predicated region
    $region42: #{tpu_custom_call.1} parent=1 // pred_check
      _
    $region43: #{tpu_custom_call.1} parent=1 // pred_check_branch
      %88 = sbr.rel (0) target = $region45
    $region44: #{tpu_custom_call.1} parent=1 // pred_region
      %89 = dma.done [#allocation10], 1024
    $region45: #{tpu_custom_call.1} parent=1 // pred_fallthru
      _
    %v91 = vld [vmem:[#allocation3] sm:$0xf]
    %v92 = vld [vmem:[#allocation3 + $0x4] sm:$0xf]
    %v93 = vld [vmem:[#allocation8] sm:$0xff]
    %v94 = vld [vmem:[#allocation8 + $0x8] sm:$0xff]
    %v95 = vld [vmem:[#allocation6] sm:$0xff]
    %v96 = vld [vmem:[#allocation6 + $0x8] sm:$0xff]
    %v97 = vld [vmem:[#allocation6 + $0x10] sm:$0xff]
    %v98 = vld [vmem:[#allocation6 + $0x18] sm:$0xff]
    %v99 = vld [vmem:[#allocation6 + $0x20] sm:$0xff]
    %v100 = vld [vmem:[#allocation6 + $0x28] sm:$0xff]
    %v101 = vld [vmem:[#allocation6 + $0x30] sm:$0xff]
    %v102 = vld [vmem:[#allocation6 + $0x38] sm:$0xff]
    %v103 = vld [vmem:[#allocation6 + $0x40] sm:$0xff]
    %v104 = vld [vmem:[#allocation6 + $0x48] sm:$0xff]
    %v105 = vld [vmem:[#allocation6 + $0x50] sm:$0xff]
    %v106 = vld [vmem:[#allocation6 + $0x58] sm:$0xff]
    %v107 = vld [vmem:[#allocation6 + $0x60] sm:$0xff]
    %v108 = vld [vmem:[#allocation6 + $0x68] sm:$0xff]
    %v109 = vld [vmem:[#allocation6 + $0x70] sm:$0xff]
    %v110 = vld [vmem:[#allocation6 + $0x78] sm:$0xff]
    %v111 = vlaneseq
    %v112 = vshrl.u32 %v111, 7
    %v113 = vsub.s32 0, %v112
    %v114 = vrot.slane %v93, %v113
    %v115 = vlaneseq
    %v116 = vshrl.u32 %v115, 7
    %v117 = vsub.s32 0, %v116
    %v118 = vrot.slane %v94, %v117
    %v121 = vunpack.c.l.b16 %v91
    %v122 = vunpack.c.l.b16 %v92
    %v123 = vpack.c.b16 %v122, %v121
    %v141 = vunpack.c.l.b16 %v95
    %v142 = vunpack.c.h.b16 %v95
    %v143 = vunpack.c.l.b16 %v96
    %v144 = vunpack.c.h.b16 %v96
    %v145 = vunpack.c.l.b16 %v97
    %v146 = vunpack.c.h.b16 %v97
    %v147 = vunpack.c.l.b16 %v98
    %v148 = vunpack.c.h.b16 %v98
    %v149 = vunpack.c.l.b16 %v99
    %v150 = vunpack.c.h.b16 %v99
    %v151 = vunpack.c.l.b16 %v100
    %v152 = vunpack.c.h.b16 %v100
    %v153 = vunpack.c.l.b16 %v101
    %v154 = vunpack.c.h.b16 %v101
    %v155 = vunpack.c.l.b16 %v102
    %v156 = vunpack.c.h.b16 %v102
    %v157 = vunpack.c.l.b16 %v103
    %v158 = vunpack.c.h.b16 %v103
    %v159 = vunpack.c.l.b16 %v104
    %v160 = vunpack.c.h.b16 %v104
    %v161 = vunpack.c.l.b16 %v105
    %v162 = vunpack.c.h.b16 %v105
    %v163 = vunpack.c.l.b16 %v106
    %v164 = vunpack.c.h.b16 %v106
    %v165 = vunpack.c.l.b16 %v107
    %v166 = vunpack.c.h.b16 %v107
    %v167 = vunpack.c.l.b16 %v108
    %v168 = vunpack.c.h.b16 %v108
    %v169 = vunpack.c.l.b16 %v109
    %v170 = vunpack.c.h.b16 %v109
    %v171 = vunpack.c.l.b16 %v110
    %v172 = vunpack.c.h.b16 %v110
    %v173 = vpack.c.b16 %v143, %v141
    %v174 = vpack.c.b16 %v144, %v142
    %v175 = vpack.c.b16 %v147, %v145
    %v176 = vpack.c.b16 %v148, %v146
    %v177 = vpack.c.b16 %v151, %v149
    %v178 = vpack.c.b16 %v152, %v150
    %v179 = vpack.c.b16 %v155, %v153
    %v180 = vpack.c.b16 %v156, %v154
    %v181 = vpack.c.b16 %v159, %v157
    %v182 = vpack.c.b16 %v160, %v158
    %v183 = vpack.c.b16 %v163, %v161
    %v184 = vpack.c.b16 %v164, %v162
    %v185 = vpack.c.b16 %v167, %v165
    %v186 = vpack.c.b16 %v168, %v166
    %v187 = vpack.c.b16 %v171, %v169
    %v188 = vpack.c.b16 %v172, %v170
    %205 = vmatprep.subr.bf16.mxu0 %v174
    %206 = vmatpush1.bf16.msra.mxu0 %v173
    %207 = vmatprep.subr.bf16.mxu0 %v176
    %208 = vmatpush1.bf16.msra.mxu0 %v175
    %209 = vmatprep.subr.bf16.mxu0 %v178
    %210 = vmatpush1.bf16.msra.mxu0 %v177
    %211 = vmatprep.subr.bf16.mxu0 %v180
    %212 = vmatpush1.bf16.msra.mxu0 %v179
    %213 = vmatprep.subr.bf16.mxu0 %v182
    %214 = vmatpush1.bf16.msra.mxu0 %v181
    %215 = vmatprep.subr.bf16.mxu0 %v184
    %216 = vmatpush1.bf16.msra.mxu0 %v183
    %217 = vmatprep.subr.bf16.mxu0 %v186
    %218 = vmatpush1.bf16.msra.mxu0 %v185
    %219 = vmatprep.subr.bf16.mxu0 %v188
    %220 = vmatpush1.bf16.msra.mxu0 %v187
    %221 = vmatprep.subr.bf16.mxu0 0
    %222 = vmatpush1.bf16.msra.mxu0 0
    %223 = vmatprep.subr.bf16.mxu0 0
    %224 = vmatpush1.bf16.msra.mxu0 0
    %225 = vmatprep.subr.bf16.mxu0 0
    %226 = vmatpush1.bf16.msra.mxu0 0
    %227 = vmatprep.subr.bf16.mxu0 0
    %228 = vmatpush1.bf16.msra.mxu0 0
    %229 = vmatprep.subr.bf16.mxu0 0
    %230 = vmatpush1.bf16.msra.mxu0 0
    %231 = vmatprep.subr.bf16.mxu0 0
    %232 = vmatpush1.bf16.msra.mxu0 0
    %233 = vmatprep.subr.bf16.mxu0 0
    %234 = vmatpush1.bf16.msra.mxu0 0
    %235 = vmatprep.subr.bf16.mxu0 0
    %236 = vmatpush1.bf16.msra.mxu0 0
    %237 = vmatprep.mubr.bf16.mxu0 0
    %238 = vmatmul.mubr.bf16.gmra.mrb[0].mxu0 %v123
    %v239 = vpop.f32.mrb[0].mxu0
    %v240 = vadd.f32 %v114, %v239
    %v241 = vpop.f32.mrb[0].mxu0
    %v242 = vadd.f32 %v118, %v241
    %v243 = vpop.f32.mrb[0].mxu0
    %v244 = vadd.f32 %v114, %v243
    %v245 = vpop.f32.mrb[0].mxu0
    %v246 = vadd.f32 %v118, %v245
    %247 = vdwg.mxu0
    %v248 = vadd.f32 %v240, %v244
    %v249 = vrot.slane %v248, 4
    %v250 = vadd.f32 %v248, %v249
    %v251 = vrot.slane %v250, 2
    %v252 = vadd.f32 %v250, %v251
    %v253 = vrot.slane %v252, 1
    %v254 = vadd.f32 %v252, %v253
    %v255 = vadd.f32 %v242, %v246
    %v256 = vrot.slane %v255, 4
    %v257 = vadd.f32 %v255, %v256
    %v258 = vrot.slane %v257, 2
    %v259 = vadd.f32 %v257, %v258
    %v260 = vrot.slane %v259, 1
    %v261 = vadd.f32 %v259, %v260
    %v262 = vrcp.pop 16.0
    %v263 = vmul.f32 %v254, %v262
    %v264 = vmul.f32 %v261, %v262
    %v265 = vsub.f32 %v240, %v263
    %v266 = vsub.f32 %v242, %v264
    %v267 = vsub.f32 %v244, %v263
    %v268 = vsub.f32 %v246, %v264
    %v269 = vmul.f32 %v265, %v265
    %v270 = vmul.f32 %v266, %v266
    %v271 = vmul.f32 %v267, %v267
    %v272 = vmul.f32 %v268, %v268
    %v273 = vadd.f32 %v269, %v271
    %v274 = vrot.slane %v273, 4
    %v275 = vadd.f32 %v273, %v274
    %v276 = vrot.slane %v275, 2
    %v277 = vadd.f32 %v275, %v276
    %v278 = vrot.slane %v277, 1
    %v279 = vadd.f32 %v277, %v278
    %v280 = vadd.f32 %v270, %v272
    %v281 = vrot.slane %v280, 4
    %v282 = vadd.f32 %v280, %v281
    %v283 = vrot.slane %v282, 2
    %v284 = vadd.f32 %v282, %v283
    %v285 = vrot.slane %v284, 1
    %v286 = vadd.f32 %v284, %v285
    %v287 = vmul.f32 %v279, %v262
    %v288 = vmul.f32 %v286, %v262
    %v289 = vadd.f32 %v287, 1e-05
    %v290 = vadd.f32 %v288, 1e-05
    %v291 = vrsqrt.pop %v289
    %v292 = vrsqrt.pop %v290
    %v293 = vmul.f32 %v291, %v93
    %v294 = vmul.f32 %v292, %v94
    %v295 = vmul.f32 %v263, %v293
    %v296 = vmul.f32 %v264, %v294
    %v299 = vrot.slane %v295, 7
    %v300 = vrot.slane %v296, 7
    %v303 = vsub.f32 %v93, %v299
    %v304 = vsub.f32 %v94, %v300
    %v305 = vlaneseq
    %v306 = vshrl.u32 %v305, 7
    %v307 = vsub.s32 1, %v306
    %v308 = vrot.slane %v293, %v307
    %v309 = vlaneseq
    %v310 = vshrl.u32 %v309, 7
    %v311 = vsub.s32 1, %v310
    %v312 = vrot.slane %v294, %v311
    %v313 = vmul.f32 %v240, %v308
    %v314 = vmul.f32 %v242, %v312
    %v315 = vmul.f32 %v244, %v308
    %v316 = vmul.f32 %v246, %v312
    %v317 = vlaneseq
    %v318 = vshrl.u32 %v317, 7
    %v319 = vsub.s32 2, %v318
    %v320 = vrot.slane %v303, %v319
    %v321 = vlaneseq
    %v322 = vshrl.u32 %v321, 7
    %v323 = vsub.s32 2, %v322
    %v324 = vrot.slane %v304, %v323
    %v325 = vadd.f32 %v313, %v320
    %v326 = vadd.f32 %v314, %v324
    %v327 = vadd.f32 %v315, %v320
    %v328 = vadd.f32 %v316, %v324
    %v329 = vmul.f32 %v325, 0.2
    %v330 = vmul.f32 %v326, 0.2
    %v331 = vmul.f32 %v327, 0.2
    %v332 = vmul.f32 %v328, 0.2
    %v333 = vmax.f32 %v325, %v329
    %v334 = vmax.f32 %v326, %v330
    %v335 = vmax.f32 %v327, %v331
    %v336 = vmax.f32 %v328, %v332
    %v337 = vpack.c.bf16 %v335, %v333
    %v338 = vpack.c.bf16 %v336, %v334
    %v339 = vld [vmem:[#allocation9] sm:$0xf]
    %v340 = vld [vmem:[#allocation9 + $0x4] sm:$0xf]
    %v341 = vld [vmem:[#allocation9 + $0x8] sm:$0xf]
    %v342 = vld [vmem:[#allocation9 + $0xc] sm:$0xf]
    %v343 = vld [vmem:[#allocation9 + $0x10] sm:$0xf]
    %v344 = vld [vmem:[#allocation9 + $0x14] sm:$0xf]
    %v345 = vld [vmem:[#allocation9 + $0x18] sm:$0xf]
    %v346 = vld [vmem:[#allocation9 + $0x1c] sm:$0xf]
    %v347 = vld [vmem:[#allocation9 + $0x20] sm:$0xf]
    %v348 = vld [vmem:[#allocation9 + $0x24] sm:$0xf]
    %v349 = vld [vmem:[#allocation9 + $0x28] sm:$0xf]
    %v350 = vld [vmem:[#allocation9 + $0x2c] sm:$0xf]
    %v351 = vld [vmem:[#allocation9 + $0x30] sm:$0xf]
    %v352 = vld [vmem:[#allocation9 + $0x34] sm:$0xf]
    %v353 = vld [vmem:[#allocation9 + $0x38] sm:$0xf]
    %v354 = vld [vmem:[#allocation9 + $0x3c] sm:$0xf]
    %v355 = vld [vmem:[#allocation9 + $0x40] sm:$0xf]
    %v356 = vld [vmem:[#allocation9 + $0x44] sm:$0xf]
    %v357 = vld [vmem:[#allocation9 + $0x48] sm:$0xf]
    %v358 = vld [vmem:[#allocation9 + $0x4c] sm:$0xf]
    %v359 = vld [vmem:[#allocation9 + $0x50] sm:$0xf]
    %v360 = vld [vmem:[#allocation9 + $0x54] sm:$0xf]
    %v361 = vld [vmem:[#allocation9 + $0x58] sm:$0xf]
    %v362 = vld [vmem:[#allocation9 + $0x5c] sm:$0xf]
    %v363 = vld [vmem:[#allocation9 + $0x60] sm:$0xf]
    %v364 = vld [vmem:[#allocation9 + $0x64] sm:$0xf]
    %v365 = vld [vmem:[#allocation9 + $0x68] sm:$0xf]
    %v366 = vld [vmem:[#allocation9 + $0x6c] sm:$0xf]
    %v367 = vld [vmem:[#allocation9 + $0x70] sm:$0xf]
    %v368 = vld [vmem:[#allocation9 + $0x74] sm:$0xf]
    %v369 = vld [vmem:[#allocation9 + $0x78] sm:$0xf]
    %v370 = vld [vmem:[#allocation9 + $0x7c] sm:$0xf]
    %v403 = vunpack.c.l.b16 %v339
    %v404 = vunpack.c.l.b16 %v340
    %v405 = vunpack.c.l.b16 %v341
    %v406 = vunpack.c.l.b16 %v342
    %v407 = vunpack.c.l.b16 %v343
    %v408 = vunpack.c.l.b16 %v344
    %v409 = vunpack.c.l.b16 %v345
    %v410 = vunpack.c.l.b16 %v346
    %v411 = vunpack.c.l.b16 %v347
    %v412 = vunpack.c.l.b16 %v348
    %v413 = vunpack.c.l.b16 %v349
    %v414 = vunpack.c.l.b16 %v350
    %v415 = vunpack.c.l.b16 %v351
    %v416 = vunpack.c.l.b16 %v352
    %v417 = vunpack.c.l.b16 %v353
    %v418 = vunpack.c.l.b16 %v354
    %v419 = vunpack.c.l.b16 %v355
    %v420 = vunpack.c.l.b16 %v356
    %v421 = vunpack.c.l.b16 %v357
    %v422 = vunpack.c.l.b16 %v358
    %v423 = vunpack.c.l.b16 %v359
    %v424 = vunpack.c.l.b16 %v360
    %v425 = vunpack.c.l.b16 %v361
    %v426 = vunpack.c.l.b16 %v362
    %v427 = vunpack.c.l.b16 %v363
    %v428 = vunpack.c.l.b16 %v364
    %v429 = vunpack.c.l.b16 %v365
    %v430 = vunpack.c.l.b16 %v366
    %v431 = vunpack.c.l.b16 %v367
    %v432 = vunpack.c.l.b16 %v368
    %v433 = vunpack.c.l.b16 %v369
    %v434 = vunpack.c.l.b16 %v370
    %v435 = vpack.c.b16 %v404, %v403
    %v436 = vpack.c.b16 %v406, %v405
    %v437 = vpack.c.b16 %v408, %v407
    %v438 = vpack.c.b16 %v410, %v409
    %v439 = vpack.c.b16 %v412, %v411
    %v440 = vpack.c.b16 %v414, %v413
    %v441 = vpack.c.b16 %v416, %v415
    %v442 = vpack.c.b16 %v418, %v417
    %v443 = vpack.c.b16 %v420, %v419
    %v444 = vpack.c.b16 %v422, %v421
    %v445 = vpack.c.b16 %v424, %v423
    %v446 = vpack.c.b16 %v426, %v425
    %v447 = vpack.c.b16 %v428, %v427
    %v448 = vpack.c.b16 %v430, %v429
    %v449 = vpack.c.b16 %v432, %v431
    %v450 = vpack.c.b16 %v434, %v433
    %467 = vmatprep.subr.bf16.mxu0 0
    %468 = vmatpush1.bf16.msra.mxu0 %v435
    %469 = vmatprep.subr.bf16.mxu0 0
    %470 = vmatpush1.bf16.msra.mxu0 %v436
    %471 = vmatprep.subr.bf16.mxu0 0
    %472 = vmatpush1.bf16.msra.mxu0 %v437
    %473 = vmatprep.subr.bf16.mxu0 0
    %474 = vmatpush1.bf16.msra.mxu0 %v438
    %475 = vmatprep.subr.bf16.mxu0 0
    %476 = vmatpush1.bf16.msra.mxu0 %v439
    %477 = vmatprep.subr.bf16.mxu0 0
    %478 = vmatpush1.bf16.msra.mxu0 %v440
    %479 = vmatprep.subr.bf16.mxu0 0
    %480 = vmatpush1.bf16.msra.mxu0 %v441
    %481 = vmatprep.subr.bf16.mxu0 0
    %482 = vmatpush1.bf16.msra.mxu0 %v442
    %483 = vmatprep.subr.bf16.mxu0 0
    %484 = vmatpush1.bf16.msra.mxu0 %v443
    %485 = vmatprep.subr.bf16.mxu0 0
    %486 = vmatpush1.bf16.msra.mxu0 %v444
    %487 = vmatprep.subr.bf16.mxu0 0
    %488 = vmatpush1.bf16.msra.mxu0 %v445
    %489 = vmatprep.subr.bf16.mxu0 0
    %490 = vmatpush1.bf16.msra.mxu0 %v446
    %491 = vmatprep.subr.bf16.mxu0 0
    %492 = vmatpush1.bf16.msra.mxu0 %v447
    %493 = vmatprep.subr.bf16.mxu0 0
    %494 = vmatpush1.bf16.msra.mxu0 %v448
    %495 = vmatprep.subr.bf16.mxu0 0
    %496 = vmatpush1.bf16.msra.mxu0 %v449
    %497 = vmatprep.subr.bf16.mxu0 0
    %498 = vmatpush1.bf16.msra.mxu0 %v450
    %499 = vmatprep.mubr.bf16.mxu0 %v338
    %500 = vmatmul.mubr.bf16.gmra.mrb[0].mxu0 %v337
    %v501 = vpop.f32.mrb[0].mxu0
    %v502 = vadd.f32 0.0, %v501
    %v503 = vpop.f32.mrb[0].mxu0
    %v504 = vpop.f32.mrb[0].mxu0
    %v505 = vadd.f32 0.0, %v504
    %v506 = vpop.f32.mrb[0].mxu0
    %507 = vdwg.mxu0
    %p508 = scmp.eq.s32.totalorder 0, 0
    // Predicated region
    $region46: #{tpu_custom_call.1} parent=1 // pred_check
      %p509 = pneg %p508
    $region47: #{tpu_custom_call.1} parent=1 // pred_check_branch
      %511 = sbr.rel (%p509) target = $region49
    $region48: #{tpu_custom_call.1} parent=1 // pred_region
      %512 = vst [vmem:[#allocation12] sm:$0xff] %v502
      %513 = vst [vmem:[#allocation12 + $0x8] sm:$0xff] %v505
      %v514 = vld [vmem:[#allocation11] sm:$0xf]
      %v515 = vld [vmem:[#allocation11 + $0x4] sm:$0xf]
      %v516 = vld [vmem:[#allocation11 + $0x8] sm:$0xf]
      %v517 = vld [vmem:[#allocation11 + $0xc] sm:$0xf]
      %v518 = vld [vmem:[#allocation11 + $0x10] sm:$0xf]
      %v519 = vld [vmem:[#allocation11 + $0x14] sm:$0xf]
      %v520 = vld [vmem:[#allocation11 + $0x18] sm:$0xf]
      %v521 = vld [vmem:[#allocation11 + $0x1c] sm:$0xf]
      %v522 = vld [vmem:[#allocation11 + $0x20] sm:$0xf]
      %v523 = vld [vmem:[#allocation11 + $0x24] sm:$0xf]
      %v524 = vld [vmem:[#allocation11 + $0x28] sm:$0xf]
      %v525 = vld [vmem:[#allocation11 + $0x2c] sm:$0xf]
      %v526 = vld [vmem:[#allocation11 + $0x30] sm:$0xf]
      %v527 = vld [vmem:[#allocation11 + $0x34] sm:$0xf]
      %v528 = vld [vmem:[#allocation11 + $0x38] sm:$0xf]
      %v529 = vld [vmem:[#allocation11 + $0x3c] sm:$0xf]
      %v530 = vld [vmem:[%s4 + $0x3] sm:$0x1]
      %v531 = vlaneseq
      %v532 = vshrl.u32 %v531, 7
      %v533 = vsub.s32 0, %v532
      %v534 = vrot.slane %v530, %v533
      %v551 = vunpack.c.l.b16 %v514
      %v552 = vunpack.c.l.b16 %v515
      %v553 = vunpack.c.l.b16 %v516
      %v554 = vunpack.c.l.b16 %v517
      %v555 = vunpack.c.l.b16 %v518
      %v556 = vunpack.c.l.b16 %v519
      %v557 = vunpack.c.l.b16 %v520
      %v558 = vunpack.c.l.b16 %v521
      %v559 = vunpack.c.l.b16 %v522
      %v560 = vunpack.c.l.b16 %v523
      %v561 = vunpack.c.l.b16 %v524
      %v562 = vunpack.c.l.b16 %v525
      %v563 = vunpack.c.l.b16 %v526
      %v564 = vunpack.c.l.b16 %v527
      %v565 = vunpack.c.l.b16 %v528
      %v566 = vunpack.c.l.b16 %v529
      %v567 = vpack.c.b16 %v552, %v551
      %v568 = vpack.c.b16 %v554, %v553
      %v569 = vpack.c.b16 %v556, %v555
      %v570 = vpack.c.b16 %v558, %v557
      %v571 = vpack.c.b16 %v560, %v559
      %v572 = vpack.c.b16 %v562, %v561
      %v573 = vpack.c.b16 %v564, %v563
      %v574 = vpack.c.b16 %v566, %v565
      %583 = vmatprep.subr.bf16.mxu0 0
      %584 = vmatpush1.bf16.msra.mxu0 %v567
      %585 = vmatprep.subr.bf16.mxu0 0
      %586 = vmatpush1.bf16.msra.mxu0 %v568
      %587 = vmatprep.subr.bf16.mxu0 0
      %588 = vmatpush1.bf16.msra.mxu0 %v569
      %589 = vmatprep.subr.bf16.mxu0 0
      %590 = vmatpush1.bf16.msra.mxu0 %v570
      %591 = vmatprep.subr.bf16.mxu0 0
      %592 = vmatpush1.bf16.msra.mxu0 %v571
      %593 = vmatprep.subr.bf16.mxu0 0
      %594 = vmatpush1.bf16.msra.mxu0 %v572
      %595 = vmatprep.subr.bf16.mxu0 0
      %596 = vmatpush1.bf16.msra.mxu0 %v573
      %597 = vmatprep.subr.bf16.mxu0 0
      %598 = vmatpush1.bf16.msra.mxu0 %v574
      %599 = vmatprep.subr.bf16.mxu0 0
      %600 = vmatpush1.bf16.msra.mxu0 0
      %601 = vmatprep.subr.bf16.mxu0 0
      %602 = vmatpush1.bf16.msra.mxu0 0
      %603 = vmatprep.subr.bf16.mxu0 0
      %604 = vmatpush1.bf16.msra.mxu0 0
      %605 = vmatprep.subr.bf16.mxu0 0
      %606 = vmatpush1.bf16.msra.mxu0 0
      %607 = vmatprep.subr.bf16.mxu0 0
      %608 = vmatpush1.bf16.msra.mxu0 0
      %609 = vmatprep.subr.bf16.mxu0 0
      %610 = vmatpush1.bf16.msra.mxu0 0
      %611 = vmatprep.subr.bf16.mxu0 0
      %612 = vmatpush1.bf16.msra.mxu0 0
      %613 = vmatprep.subr.bf16.mxu0 0
      %614 = vmatpush1.bf16.msra.mxu0 0
      %615 = vmatprep.mubr.bf16.mxu0 0
      %616 = vmatmul.mubr.bf16.gmra.mrb[0].mxu0 %v123
      %v617 = vpop.f32.mrb[0].mxu0
      %v618 = vadd.f32 %v534, %v617
      %v619 = vpop.f32.mrb[0].mxu0
      %v620 = vpop.f32.mrb[0].mxu0
      %v621 = vadd.f32 %v534, %v620
      %v622 = vpop.f32.mrb[0].mxu0
      %623 = vdwg.mxu0
      %v624 = vmul.f32 %v618, 0.2
      %v625 = vmul.f32 %v621, 0.2
      %v626 = vmax.f32 %v618, %v624
      %v627 = vmax.f32 %v621, %v625
      %628 = vst [vmem:[#allocation2] sm:$0xff] %v626
      %629 = vst [vmem:[#allocation2 + $0x8] sm:$0xff] %v627
    $region49: #{tpu_custom_call.1} parent=1 // pred_fallthru
      _
    %p630 = scmp.gt.s32.totalorder 0, 0
    // Predicated region
    $region50: #{tpu_custom_call.1} parent=1 // pred_check
      %p631 = pneg %p630
    $region51: #{tpu_custom_call.1} parent=1 // pred_check_branch
      %633 = sbr.rel (%p631) target = $region53
    $region52: #{tpu_custom_call.1} parent=1 // pred_region
      %v634 = vld [vmem:[#allocation12] sm:$0xff]
      %v635 = vld [vmem:[#allocation12 + $0x8] sm:$0xff]
      %v636 = vadd.f32 %v634, %v502
      %v637 = vadd.f32 %v635, %v505
      %638 = vst [vmem:[#allocation12] sm:$0xff] %v636
      %639 = vst [vmem:[#allocation12 + $0x8] sm:$0xff] %v637
    $region53: #{tpu_custom_call.1} parent=1 // pred_fallthru
      _
    // Predicated region
    $region54: #{tpu_custom_call.1} parent=1 // pred_check
      %p640 = pneg %p508
    $region55: #{tpu_custom_call.1} parent=1 // pred_check_branch
      %642 = sbr.rel (%p640) target = $region57
    $region56: #{tpu_custom_call.1} parent=1 // pred_region
      %v643 = vld [vmem:[%s4] sm:$0xff]
      %v644 = vld [vmem:[#allocation12] sm:$0xff]
      %v645 = vld [vmem:[#allocation12 + $0x8] sm:$0xff]
      %v646 = vlaneseq
      %v647 = vshrl.u32 %v646, 7
      %v648 = vsub.s32 0, %v647
      %v649 = vrot.slane %v643, %v648
      %v650 = vadd.f32 %v644, %v649
      %v651 = vadd.f32 %v645, %v649
      %v652 = vadd.f32 %v650, %v651
      %v653 = vrot.slane %v652, 4
      %v654 = vadd.f32 %v652, %v653
      %v655 = vrot.slane %v654, 2
      %v656 = vadd.f32 %v654, %v655
      %v657 = vrot.slane %v656, 1
      %v658 = vadd.f32 %v656, %v657
      %v659 = vmul.f32 %v658, %v262
      %v660 = vsub.f32 %v650, %v659
      %v661 = vsub.f32 %v651, %v659
      %v662 = vmul.f32 %v660, %v660
      %v663 = vmul.f32 %v661, %v661
      %v664 = vadd.f32 %v662, %v663
      %v665 = vrot.slane %v664, 4
      %v666 = vadd.f32 %v664, %v665
      %v667 = vrot.slane %v666, 2
      %v668 = vadd.f32 %v666, %v667
      %v669 = vrot.slane %v668, 1
      %v670 = vadd.f32 %v668, %v669
      %v671 = vmul.f32 %v670, %v262
      %v672 = vadd.f32 %v671, 1e-05
      %v673 = vrsqrt.pop %v672
      %v674 = vmul.f32 %v673, %v643
      %v675 = vmul.f32 %v659, %v674
      %v677 = vrot.slane %v675, 7
      %v679 = vsub.f32 %v643, %v677
      %v680 = vlaneseq
      %v681 = vshrl.u32 %v680, 7
      %v682 = vsub.s32 1, %v681
      %v683 = vrot.slane %v674, %v682
      %v684 = vmul.f32 %v650, %v683
      %v685 = vmul.f32 %v651, %v683
      %v686 = vlaneseq
      %v687 = vshrl.u32 %v686, 7
      %v688 = vsub.s32 2, %v687
      %v689 = vrot.slane %v679, %v688
      %v690 = vadd.f32 %v684, %v689
      %v691 = vadd.f32 %v685, %v689
      %v692 = vld [vmem:[#allocation2] sm:$0xff]
      %v693 = vld [vmem:[#allocation2 + $0x8] sm:$0xff]
      %v694 = vadd.f32 %v692, %v690
      %v695 = vadd.f32 %v693, %v691
      %v696 = vmul.f32 %v694, 0.2
      %v697 = vmul.f32 %v695, 0.2
      %v698 = vmax.f32 %v694, %v696
      %v699 = vmax.f32 %v695, %v697
      %700 = vst [vmem:[#allocation12] sm:$0xff] %v698
      %701 = vst [vmem:[#allocation12 + $0x8] sm:$0xff] %v699
    $region57: #{tpu_custom_call.1} parent=1 // pred_fallthru
      _
    // Predicated region
    $region58: #{tpu_custom_call.1} parent=1 // pred_check
      _
    $region59: #{tpu_custom_call.1} parent=1 // pred_check_branch
      %703 = sbr.rel (0) target = $region61
    $region60: #{tpu_custom_call.1} parent=1 // pred_region
      %s705 = ssub.s32 256, 256
      %706 = vsyncadd [#allocation5], %s705
      %s707 = sshll.u32 [#allocation12], 4
      %s708 = int_to_ptr.vmem [resolvable:$true] %s707
      %713 = dma.vmem_to_hbm [thread:$0]  %s708, 256, %s6, [#allocation5], 128, 128, 8
    $region61: #{tpu_custom_call.1} parent=1 // pred_fallthru
      _
    // Predicated region
    $region62: #{tpu_custom_call.1} parent=1 // pred_check
      _
    $region63: #{tpu_custom_call.1} parent=1 // pred_check_branch
      %715 = sbr.rel (0) target = $region65
    $region64: #{tpu_custom_call.1} parent=1 // pred_region
      %716 = dma.done [#allocation5], 256
    $region65: #{tpu_custom_call.1} parent=1 // pred_fallthru
      _
    %717 = vsyncpa [#allocation4], 1
    %718 = vsyncpa [#allocation7], 1
    %719 = vsyncpa [#allocation10], 1
    %720 = vsyncpa [#allocation5], 1

</llo_original>
